<compile_context>
chip_gen: v5e
topology: v5e:2x2
jax: 0.10.0
libtpu: 0.0.40
codegen_flags: <defaults>
</compile_context>

<pallas_src>
import numpy as np
import jax
import jax.numpy as jnp
from jax import lax
from jax.experimental import pallas as pl
from jax.experimental.pallas import tpu as pltpu

BN_EPS = 1e-5

# bf16 MXU path for v6e/v7x (f32 accumulation, f32 BN statistics).  Off by default so the
# all-f32 kernel stays well inside the 2e-3 check vs. the Precision.HIGHEST reference;
# enabling it loosens the stacked two-layer error to roughly 1e-2.
USE_BF16_MXU = False


# --------------------------- host-side constant folding ---------------------------------
def _fold_dx_taps(w_hwio, W):
    """Fold the 3 horizontal taps (+ x-edge replication) and the channel contraction of a
    3x3 conv into per-dy matmul matrices.

    w_hwio: (3, 3, Cin, Cout)  ->  (3, W*Cin, W*Cout) with
      M[dy, xs*Cin+ci, x*Cout+co] = sum_{dx : clip(x+dx-1,0,W-1)==xs} w[dy, dx, ci, co]
    so (X2d @ M[dy])[r, x*Cout+co] = sum_{dx,ci} w[dy,dx,ci,co] * X[r, clip(x+dx-1), ci].
    (In a real model, fold these once at parameter-prep time, not per forward call.)
    """
    _, _, cin, cout = w_hwio.shape
    xs = np.arange(W)
    mats = []
    for dy in range(3):
        m = jnp.zeros((W * cin, W * cout), w_hwio.dtype)
        for dx in range(3):
            src = np.clip(xs + dx - 1, 0, W - 1)                 # source col per output col
            shift = jnp.asarray(
                (np.arange(W)[:, None] == src[None, :]).astype(np.float32))   # (W_src, W_out)
            m = m + jnp.kron(shift, w_hwio[dy, dx])              # (W*Cin, W*Cout)
        mats.append(m)
    return jnp.stack(mats, axis=0)


def _row_shift_mats(N, H):
    """0/1 row-selection matrices for the 3 vertical taps with per-image replicate edges.

    S[dy, r, r'] = 1  iff  r' = (r//H)*H + clip(r%H + dy-1, 0, H-1), so
    (S[dy] @ T)[r] = T[row of (same image, clamped y+dy-1)].  No cross-image leakage.
    """
    R = N * H
    rows = np.arange(R)
    n, y = rows // H, rows % H
    s = np.zeros((3, R, R), np.float32)
    for dy in range(3):
        src = n * H + np.clip(y + dy - 1, 0, H - 1)
        s[dy, rows, src] = 1.0
    return jnp.asarray(s)


def _channel_pool_mat(W, C):
    """Q (W*C, W*C) with Q[x*C+ci, x'*C+co] = (ci == co).  (v @ Q) replaces every lane with
    the sum of its channel group across all x -- the cross-x half of the per-channel
    BatchNorm reduction, done as a matmul so stats stay in the lane-dense layout."""
    lanes = np.arange(W * C) % C
    return jnp.asarray((lanes[:, None] == lanes[None, :]).astype(np.float32))


# ------------------------------------ kernel --------------------------------------------
def _make_double_conv_kernel(n, h, w):
    inv_cnt = 1.0 / float(n * h * w)   # BN batch-stat count: per channel over (N, H, W)

    def conv_bn_relu(x2d, s_ref, m_ref, q_ref, g_row, b_row):
        # x2d:   (R, W*Cin) f32           m_ref: (3, W*Cin, W*Cout)
        # s_ref: (3, R, R) 0/1            q_ref: (W*Cout, W*Cout) 0/1
        # g_row/b_row: (1, W*Cout) f32 (per-channel affine, tiled across x)
        xmm = x2d.astype(jnp.bfloat16) if USE_BF16_MXU else x2d
        acc = None
        for dy in range(3):                                   # static, fully unrolled
            m = m_ref[dy]
            if USE_BF16_MXU:
                m = m.astype(jnp.bfloat16)
            t = jnp.dot(xmm, m, preferred_element_type=jnp.float32)        # dx taps + channels
            c = jnp.dot(s_ref[dy], t, preferred_element_type=jnp.float32)  # dy tap (exact select)
            acc = c if acc is None else acc + c                            # (R, W*Cout) f32

        # Train-mode BatchNorm, shifted two-pass variance, in the lane-dense layout.
        # Conv bias omitted: cancels exactly against the batch mean (batch stats only).
        q = q_ref[...]
        mean = jnp.sum(jnp.dot(acc, q, preferred_element_type=jnp.float32),
                       axis=0, keepdims=True) * inv_cnt                    # (1, W*Cout)
        d = acc - mean
        var = jnp.sum(jnp.dot(d * d, q, preferred_element_type=jnp.float32),
                      axis=0, keepdims=True) * inv_cnt
        scale = g_row * lax.rsqrt(var + BN_EPS)                             # EUP rsqrt
        return jnp.maximum(d * scale + b_row, 0.0)

    def kernel(x_ref, s_ref, m1_ref, q1_ref, g1_ref, b1_ref,
               m2_ref, q2_ref, g2_ref, b2_ref, o_ref):
        x = x_ref[...].astype(jnp.float32)
        y1 = conv_bn_relu(x, s_ref, m1_ref, q1_ref,
                          g1_ref[...].astype(jnp.float32),
                          b1_ref[...].astype(jnp.float32))   # (R, W*C1): stays in VMEM/vregs
        y2 = conv_bn_relu(y1, s_ref, m2_ref, q2_ref,
                          g2_ref[...].astype(jnp.float32),
                          b2_ref[...].astype(jnp.float32))   # (R, W*C2)
        o_ref[...] = y2.astype(o_ref.dtype)                  # 128-lane-dense, unmasked store

    return kernel


# ----------------------------------- wrappers --------------------------------------------
def double_conv_nhwc(x_nhwc, params):
    """Fused DoubleConv on NHWC input: (N, H, W, Cin) -> (N, H, W, Cout)."""
    (w1, b1, g1, be1), (w2, b2, g2, be2) = params
    del b1, b2   # conv bias cancels exactly under train-mode (batch-stat) BatchNorm
    N, H, W, Cin = x_nhwc.shape
    C1, C2 = w1.shape[-1], w2.shape[-1]

    # Lane-dense input view + folded constants (pure XLA glue outside the kernel).
    x2d = x_nhwc.reshape(N * H, W * Cin)                 # free reshape, no transpose
    s   = _row_shift_mats(N, H)                          # (3, N*H, N*H)
    m1  = _fold_dx_taps(w1, W)                           # (3, W*Cin, W*C1)
    m2  = _fold_dx_taps(w2, W)                           # (3, W*C1,  W*C2)
    q1  = _channel_pool_mat(W, C1)
    q2  = _channel_pool_mat(W, C2)
    g1t = jnp.tile(g1.reshape(1, C1), (1, W))
    b1t = jnp.tile(be1.reshape(1, C1), (1, W))
    g2t = jnp.tile(g2.reshape(1, C2), (1, W))
    b2t = jnp.tile(be2.reshape(1, C2), (1, W))

    vmem = pl.BlockSpec(memory_space=pltpu.MemorySpace.VMEM)
    y2d = pl.pallas_call(
        _make_double_conv_kernel(N, H, W),
        out_shape=jax.ShapeDtypeStruct((N * H, W * C2), x_nhwc.dtype),
        in_specs=[vmem] * 10,
        out_specs=vmem,
        compiler_params=pltpu.CompilerParams(
            # <1 MiB needed here; 32 MiB is safe on every generation (v7x: 64 MiB/TC
            # physical).  A tiled UNet-scale variant must size its own per-generation
            # budget (~48 MiB usable on v7x, up to ~100 MiB on v5e/v6e), not inherit this.
            vmem_limit_bytes=32 * 1024 * 1024,
        ),
    )(x2d, s, m1, q1, g1t, b1t, m2, q2, g2t, b2t)
    return y2d.reshape(N, H, W, C2)


def double_conv(x_nchw, params):
    """PyTorch-layout DoubleConv: (N, Cin, H, W) -> (N, Cout, H, W).

    The NCHW<->NHWC transposes are XLA glue kept only for parity with the nn.Module
    interface; prefer double_conv_nhwc end-to-end inside an NHWC model.
    """
    x = jnp.transpose(x_nchw, (0, 2, 3, 1))  # NCHW -> NHWC
    y = double_conv_nhwc(x, params)
    return jnp.transpose(y, (0, 3, 1, 2))    # NHWC -> NCHW


# ----------------------------- reference (pure JAX) --------------------------------------
def _ref_conv_bn_relu(x, w, b, g, beta):
    xp = jnp.pad(x, ((0, 0), (1, 1), (1, 1), (0, 0)), mode="edge")
    y = lax.conv_general_dilated(
        xp, w, window_strides=(1, 1), padding="VALID",
        dimension_numbers=("NHWC", "HWIO", "NHWC"),
        precision=lax.Precision.HIGHEST)
    y = y + b.reshape(1, 1, 1, -1)
    mean = jnp.mean(y, axis=(0, 1, 2), keepdims=True)
    var = jnp.mean((y - mean) ** 2, axis=(0, 1, 2), keepdims=True)
    y = (y - mean) * lax.rsqrt(var + BN_EPS)
    y = y * g.reshape(1, 1, 1, -1) + beta.reshape(1, 1, 1, -1)
    return jnp.maximum(y, 0.0)


def _ref_double_conv(x_nchw, params):
    (w1, b1, g1, beta1), (w2, b2, g2, beta2) = params
    x = jnp.transpose(x_nchw, (0, 2, 3, 1))
    y = _ref_conv_bn_relu(x, w1, b1, g1, beta1)
    y = _ref_conv_bn_relu(y, w2, b2, g2, beta2)
    return jnp.transpose(y, (0, 3, 1, 2))


# ----------------------------------- main -------------------------------------------------
if __name__ == "__main__":
    key = jax.random.PRNGKey(0)
    N, Cin, Cout, H, W = 2, 4, 8, 16, 16

    ks = jax.random.split(key, 9)
    x = jax.random.normal(ks[0], (N, Cin, H, W), dtype=jnp.float32)

    # Deterministic synthetic parameters (shapes from nn.Conv2d / nn.BatchNorm2d).
    w1 = jax.random.normal(ks[1], (3, 3, Cin, Cout), jnp.float32) * 0.1   # HWIO
    b1 = jax.random.normal(ks[2], (1, Cout), jnp.float32) * 0.1           # conv bias
    g1 = 1.0 + 0.1 * jax.random.normal(ks[3], (1, Cout), jnp.float32)
    beta1 = 0.1 * jax.random.normal(ks[4], (1, Cout), jnp.float32)

    w2 = jax.random.normal(ks[5], (3, 3, Cout, Cout), jnp.float32) * 0.1
    b2 = jax.random.normal(ks[6], (1, Cout), jnp.float32) * 0.1
    g2 = 1.0 + 0.1 * jax.random.normal(ks[7], (1, Cout), jnp.float32)
    beta2 = 0.1 * jax.random.normal(ks[8], (1, Cout), jnp.float32)

    params = ((w1, b1, g1, beta1), (w2, b2, g2, beta2))

    out = jax.block_until_ready(double_conv(x, params))
    ref = jax.block_until_ready(_ref_double_conv(x, params))

    assert out.shape == (N, Cout, H, W), out.shape
    assert jnp.allclose(out, ref, atol=2e-3, rtol=2e-3), float(jnp.max(jnp.abs(out - ref)))

    print("KERNEL_OK")
</pallas_src>

<mosaic_0001>
module attributes {stable_mosaic.version = 11 : i64} {
  func.func @kernel(%arg0: memref<32x64xf32, #tpu.memory_space<vmem>>, %arg1: memref<3x32x32xf32, #tpu.memory_space<vmem>>, %arg2: memref<3x64x128xf32, #tpu.memory_space<vmem>>, %arg3: memref<128x128xf32, #tpu.memory_space<vmem>>, %arg4: memref<1x128xf32, #tpu.memory_space<vmem>>, %arg5: memref<1x128xf32, #tpu.memory_space<vmem>>, %arg6: memref<3x128x128xf32, #tpu.memory_space<vmem>>, %arg7: memref<128x128xf32, #tpu.memory_space<vmem>>, %arg8: memref<1x128xf32, #tpu.memory_space<vmem>>, %arg9: memref<1x128xf32, #tpu.memory_space<vmem>>, %arg10: memref<32x128xf32, #tpu.memory_space<vmem>>) attributes {dimension_semantics = [], scalar_prefetch = 0 : i64, scratch_operands = 0 : i64, tpu.core_type = #tpu.core_type<tc>} {
    %c0 = arith.constant 0 : index
    %c0_0 = arith.constant 0 : index
    %0 = vector.load %arg0[%c0, %c0_0] : memref<32x64xf32, #tpu.memory_space<vmem>>, vector<32x64xf32>
    %c0_1 = arith.constant 0 : index
    %c0_2 = arith.constant 0 : index
    %1 = vector.load %arg4[%c0_1, %c0_2] : memref<1x128xf32, #tpu.memory_space<vmem>>, vector<1x128xf32>
    %c0_3 = arith.constant 0 : index
    %c0_4 = arith.constant 0 : index
    %2 = vector.load %arg5[%c0_3, %c0_4] : memref<1x128xf32, #tpu.memory_space<vmem>>, vector<1x128xf32>
    %c0_5 = arith.constant 0 : index
    %c0_6 = arith.constant 0 : index
    %c0_7 = arith.constant 0 : index
    %3 = vector.load %arg2[%c0_5, %c0_6, %c0_7] : memref<3x64x128xf32, #tpu.memory_space<vmem>>, vector<1x64x128xf32>
    %4 = vector.shape_cast %3 : vector<1x64x128xf32> to vector<64x128xf32>
    %cst = arith.constant dense<0.000000e+00> : vector<32x128xf32>
    %5 = tpu.matmul %0, %4, %cst {dimension_numbers = #tpu.dot_dimension_numbers<[1], [0], [0], [1], [0, 0, 1, 1], [], []>} : vector<32x64xf32>, vector<64x128xf32>, vector<32x128xf32> -> vector<32x128xf32>
    %c0_8 = arith.constant 0 : index
    %c0_9 = arith.constant 0 : index
    %c0_10 = arith.constant 0 : index
    %6 = vector.load %arg1[%c0_8, %c0_9, %c0_10] : memref<3x32x32xf32, #tpu.memory_space<vmem>>, vector<1x32x32xf32>
    %7 = vector.shape_cast %6 : vector<1x32x32xf32> to vector<32x32xf32>
    %cst_11 = arith.constant dense<0.000000e+00> : vector<32x128xf32>
    %8 = tpu.matmul %7, %5, %cst_11 {dimension_numbers = #tpu.dot_dimension_numbers<[1], [0], [0], [1], [0, 0, 1, 1], [], []>} : vector<32x32xf32>, vector<32x128xf32>, vector<32x128xf32> -> vector<32x128xf32>
    %c1 = arith.constant 1 : index
    %c0_12 = arith.constant 0 : index
    %c0_13 = arith.constant 0 : index
    %9 = vector.load %arg2[%c1, %c0_12, %c0_13] : memref<3x64x128xf32, #tpu.memory_space<vmem>>, vector<1x64x128xf32>
    %10 = vector.shape_cast %9 : vector<1x64x128xf32> to vector<64x128xf32>
    %cst_14 = arith.constant dense<0.000000e+00> : vector<32x128xf32>
    %11 = tpu.matmul %0, %10, %cst_14 {dimension_numbers = #tpu.dot_dimension_numbers<[1], [0], [0], [1], [0, 0, 1, 1], [], []>} : vector<32x64xf32>, vector<64x128xf32>, vector<32x128xf32> -> vector<32x128xf32>
    %c1_15 = arith.constant 1 : index
    %c0_16 = arith.constant 0 : index
    %c0_17 = arith.constant 0 : index
    %12 = vector.load %arg1[%c1_15, %c0_16, %c0_17] : memref<3x32x32xf32, #tpu.memory_space<vmem>>, vector<1x32x32xf32>
    %13 = vector.shape_cast %12 : vector<1x32x32xf32> to vector<32x32xf32>
    %cst_18 = arith.constant dense<0.000000e+00> : vector<32x128xf32>
    %14 = tpu.matmul %13, %11, %cst_18 {dimension_numbers = #tpu.dot_dimension_numbers<[1], [0], [0], [1], [0, 0, 1, 1], [], []>} : vector<32x32xf32>, vector<32x128xf32>, vector<32x128xf32> -> vector<32x128xf32>
    %15 = arith.addf %8, %14 : vector<32x128xf32>
    %c2 = arith.constant 2 : index
    %c0_19 = arith.constant 0 : index
    %c0_20 = arith.constant 0 : index
    %16 = vector.load %arg2[%c2, %c0_19, %c0_20] : memref<3x64x128xf32, #tpu.memory_space<vmem>>, vector<1x64x128xf32>
    %17 = vector.shape_cast %16 : vector<1x64x128xf32> to vector<64x128xf32>
    %cst_21 = arith.constant dense<0.000000e+00> : vector<32x128xf32>
    %18 = tpu.matmul %0, %17, %cst_21 {dimension_numbers = #tpu.dot_dimension_numbers<[1], [0], [0], [1], [0, 0, 1, 1], [], []>} : vector<32x64xf32>, vector<64x128xf32>, vector<32x128xf32> -> vector<32x128xf32>
    %c2_22 = arith.constant 2 : index
    %c0_23 = arith.constant 0 : index
    %c0_24 = arith.constant 0 : index
    %19 = vector.load %arg1[%c2_22, %c0_23, %c0_24] : memref<3x32x32xf32, #tpu.memory_space<vmem>>, vector<1x32x32xf32>
    %20 = vector.shape_cast %19 : vector<1x32x32xf32> to vector<32x32xf32>
    %cst_25 = arith.constant dense<0.000000e+00> : vector<32x128xf32>
    %21 = tpu.matmul %20, %18, %cst_25 {dimension_numbers = #tpu.dot_dimension_numbers<[1], [0], [0], [1], [0, 0, 1, 1], [], []>} : vector<32x32xf32>, vector<32x128xf32>, vector<32x128xf32> -> vector<32x128xf32>
    %22 = arith.addf %15, %21 : vector<32x128xf32>
    %c0_26 = arith.constant 0 : index
    %c0_27 = arith.constant 0 : index
    %23 = vector.load %arg3[%c0_26, %c0_27] : memref<128x128xf32, #tpu.memory_space<vmem>>, vector<128x128xf32>
    %cst_28 = arith.constant dense<0.000000e+00> : vector<32x128xf32>
    %24 = tpu.matmul %22, %23, %cst_28 {dimension_numbers = #tpu.dot_dimension_numbers<[1], [0], [0], [1], [0, 0, 1, 1], [], []>} : vector<32x128xf32>, vector<128x128xf32>, vector<32x128xf32> -> vector<32x128xf32>
    %cst_29 = arith.constant dense<0.000000e+00> : vector<128xf32>
    %25 = vector.multi_reduction <add>, %24, %cst_29 [0] : vector<32x128xf32> to vector<128xf32>
    %26 = vector.shape_cast %25 : vector<128xf32> to vector<1x128xf32>
    %cst_30 = arith.constant 0.001953125 : f32
    %27 = vector.broadcast %cst_30 : f32 to vector<1x128xf32>
    %28 = arith.mulf %26, %27 : vector<1x128xf32>
    %29 = vector.broadcast %28 : vector<1x128xf32> to vector<32x128xf32>
    %30 = arith.subf %22, %29 : vector<32x128xf32>
    %31 = arith.mulf %30, %30 : vector<32x128xf32>
    %cst_31 = arith.constant dense<0.000000e+00> : vector<32x128xf32>
    %32 = tpu.matmul %31, %23, %cst_31 {dimension_numbers = #tpu.dot_dimension_numbers<[1], [0], [0], [1], [0, 0, 1, 1], [], []>} : vector<32x128xf32>, vector<128x128xf32>, vector<32x128xf32> -> vector<32x128xf32>
    %cst_32 = arith.constant dense<0.000000e+00> : vector<128xf32>
    %33 = vector.multi_reduction <add>, %32, %cst_32 [0] : vector<32x128xf32> to vector<128xf32>
    %34 = vector.shape_cast %33 : vector<128xf32> to vector<1x128xf32>
    %cst_33 = arith.constant 0.001953125 : f32
    %35 = vector.broadcast %cst_33 : f32 to vector<1x128xf32>
    %36 = arith.mulf %34, %35 : vector<1x128xf32>
    %cst_34 = arith.constant 9.99999974E-6 : f32
    %37 = vector.broadcast %cst_34 : f32 to vector<1x128xf32>
    %38 = arith.addf %36, %37 : vector<1x128xf32>
    %39 = math.rsqrt %38 : vector<1x128xf32>
    %40 = arith.mulf %1, %39 : vector<1x128xf32>
    %41 = vector.broadcast %40 : vector<1x128xf32> to vector<32x128xf32>
    %42 = arith.mulf %30, %41 : vector<32x128xf32>
    %43 = vector.broadcast %2 : vector<1x128xf32> to vector<32x128xf32>
    %44 = arith.addf %42, %43 : vector<32x128xf32>
    %cst_35 = arith.constant 0.000000e+00 : f32
    %45 = vector.broadcast %cst_35 : f32 to vector<32x128xf32>
    %46 = arith.maximumf %44, %45 : vector<32x128xf32>
    %c0_36 = arith.constant 0 : index
    %c0_37 = arith.constant 0 : index
    %47 = vector.load %arg8[%c0_36, %c0_37] : memref<1x128xf32, #tpu.memory_space<vmem>>, vector<1x128xf32>
    %c0_38 = arith.constant 0 : index
    %c0_39 = arith.constant 0 : index
    %48 = vector.load %arg9[%c0_38, %c0_39] : memref<1x128xf32, #tpu.memory_space<vmem>>, vector<1x128xf32>
    %c0_40 = arith.constant 0 : index
    %c0_41 = arith.constant 0 : index
    %c0_42 = arith.constant 0 : index
    %49 = vector.load %arg6[%c0_40, %c0_41, %c0_42] : memref<3x128x128xf32, #tpu.memory_space<vmem>>, vector<1x128x128xf32>
    %50 = vector.shape_cast %49 : vector<1x128x128xf32> to vector<128x128xf32>
    %cst_43 = arith.constant dense<0.000000e+00> : vector<32x128xf32>
    %51 = tpu.matmul %46, %50, %cst_43 {dimension_numbers = #tpu.dot_dimension_numbers<[1], [0], [0], [1], [0, 0, 1, 1], [], []>} : vector<32x128xf32>, vector<128x128xf32>, vector<32x128xf32> -> vector<32x128xf32>
    %c0_44 = arith.constant 0 : index
    %c0_45 = arith.constant 0 : index
    %c0_46 = arith.constant 0 : index
    %52 = vector.load %arg1[%c0_44, %c0_45, %c0_46] : memref<3x32x32xf32, #tpu.memory_space<vmem>>, vector<1x32x32xf32>
    %53 = vector.shape_cast %52 : vector<1x32x32xf32> to vector<32x32xf32>
    %cst_47 = arith.constant dense<0.000000e+00> : vector<32x128xf32>
    %54 = tpu.matmul %53, %51, %cst_47 {dimension_numbers = #tpu.dot_dimension_numbers<[1], [0], [0], [1], [0, 0, 1, 1], [], []>} : vector<32x32xf32>, vector<32x128xf32>, vector<32x128xf32> -> vector<32x128xf32>
    %c1_48 = arith.constant 1 : index
    %c0_49 = arith.constant 0 : index
    %c0_50 = arith.constant 0 : index
    %55 = vector.load %arg6[%c1_48, %c0_49, %c0_50] : memref<3x128x128xf32, #tpu.memory_space<vmem>>, vector<1x128x128xf32>
    %56 = vector.shape_cast %55 : vector<1x128x128xf32> to vector<128x128xf32>
    %cst_51 = arith.constant dense<0.000000e+00> : vector<32x128xf32>
    %57 = tpu.matmul %46, %56, %cst_51 {dimension_numbers = #tpu.dot_dimension_numbers<[1], [0], [0], [1], [0, 0, 1, 1], [], []>} : vector<32x128xf32>, vector<128x128xf32>, vector<32x128xf32> -> vector<32x128xf32>
    %c1_52 = arith.constant 1 : index
    %c0_53 = arith.constant 0 : index
    %c0_54 = arith.constant 0 : index
    %58 = vector.load %arg1[%c1_52, %c0_53, %c0_54] : memref<3x32x32xf32, #tpu.memory_space<vmem>>, vector<1x32x32xf32>
    %59 = vector.shape_cast %58 : vector<1x32x32xf32> to vector<32x32xf32>
    %cst_55 = arith.constant dense<0.000000e+00> : vector<32x128xf32>
    %60 = tpu.matmul %59, %57, %cst_55 {dimension_numbers = #tpu.dot_dimension_numbers<[1], [0], [0], [1], [0, 0, 1, 1], [], []>} : vector<32x32xf32>, vector<32x128xf32>, vector<32x128xf32> -> vector<32x128xf32>
    %61 = arith.addf %54, %60 : vector<32x128xf32>
    %c2_56 = arith.constant 2 : index
    %c0_57 = arith.constant 0 : index
    %c0_58 = arith.constant 0 : index
    %62 = vector.load %arg6[%c2_56, %c0_57, %c0_58] : memref<3x128x128xf32, #tpu.memory_space<vmem>>, vector<1x128x128xf32>
    %63 = vector.shape_cast %62 : vector<1x128x128xf32> to vector<128x128xf32>
    %cst_59 = arith.constant dense<0.000000e+00> : vector<32x128xf32>
    %64 = tpu.matmul %46, %63, %cst_59 {dimension_numbers = #tpu.dot_dimension_numbers<[1], [0], [0], [1], [0, 0, 1, 1], [], []>} : vector<32x128xf32>, vector<128x128xf32>, vector<32x128xf32> -> vector<32x128xf32>
    %c2_60 = arith.constant 2 : index
    %c0_61 = arith.constant 0 : index
    %c0_62 = arith.constant 0 : index
    %65 = vector.load %arg1[%c2_60, %c0_61, %c0_62] : memref<3x32x32xf32, #tpu.memory_space<vmem>>, vector<1x32x32xf32>
    %66 = vector.shape_cast %65 : vector<1x32x32xf32> to vector<32x32xf32>
    %cst_63 = arith.constant dense<0.000000e+00> : vector<32x128xf32>
    %67 = tpu.matmul %66, %64, %cst_63 {dimension_numbers = #tpu.dot_dimension_numbers<[1], [0], [0], [1], [0, 0, 1, 1], [], []>} : vector<32x32xf32>, vector<32x128xf32>, vector<32x128xf32> -> vector<32x128xf32>
    %68 = arith.addf %61, %67 : vector<32x128xf32>
    %c0_64 = arith.constant 0 : index
    %c0_65 = arith.constant 0 : index
    %69 = vector.load %arg7[%c0_64, %c0_65] : memref<128x128xf32, #tpu.memory_space<vmem>>, vector<128x128xf32>
    %cst_66 = arith.constant dense<0.000000e+00> : vector<32x128xf32>
    %70 = tpu.matmul %68, %69, %cst_66 {dimension_numbers = #tpu.dot_dimension_numbers<[1], [0], [0], [1], [0, 0, 1, 1], [], []>} : vector<32x128xf32>, vector<128x128xf32>, vector<32x128xf32> -> vector<32x128xf32>
    %cst_67 = arith.constant dense<0.000000e+00> : vector<128xf32>
    %71 = vector.multi_reduction <add>, %70, %cst_67 [0] : vector<32x128xf32> to vector<128xf32>
    %72 = vector.shape_cast %71 : vector<128xf32> to vector<1x128xf32>
    %cst_68 = arith.constant 0.001953125 : f32
    %73 = vector.broadcast %cst_68 : f32 to vector<1x128xf32>
    %74 = arith.mulf %72, %73 : vector<1x128xf32>
    %75 = vector.broadcast %74 : vector<1x128xf32> to vector<32x128xf32>
    %76 = arith.subf %68, %75 : vector<32x128xf32>
    %77 = arith.mulf %76, %76 : vector<32x128xf32>
    %cst_69 = arith.constant dense<0.000000e+00> : vector<32x128xf32>
    %78 = tpu.matmul %77, %69, %cst_69 {dimension_numbers = #tpu.dot_dimension_numbers<[1], [0], [0], [1], [0, 0, 1, 1], [], []>} : vector<32x128xf32>, vector<128x128xf32>, vector<32x128xf32> -> vector<32x128xf32>
    %cst_70 = arith.constant dense<0.000000e+00> : vector<128xf32>
    %79 = vector.multi_reduction <add>, %78, %cst_70 [0] : vector<32x128xf32> to vector<128xf32>
    %80 = vector.shape_cast %79 : vector<128xf32> to vector<1x128xf32>
    %cst_71 = arith.constant 0.001953125 : f32
    %81 = vector.broadcast %cst_71 : f32 to vector<1x128xf32>
    %82 = arith.mulf %80, %81 : vector<1x128xf32>
    %cst_72 = arith.constant 9.99999974E-6 : f32
    %83 = vector.broadcast %cst_72 : f32 to vector<1x128xf32>
    %84 = arith.addf %82, %83 : vector<1x128xf32>
    %85 = math.rsqrt %84 : vector<1x128xf32>
    %86 = arith.mulf %47, %85 : vector<1x128xf32>
    %87 = vector.broadcast %86 : vector<1x128xf32> to vector<32x128xf32>
    %88 = arith.mulf %76, %87 : vector<32x128xf32>
    %89 = vector.broadcast %48 : vector<1x128xf32> to vector<32x128xf32>
    %90 = arith.addf %88, %89 : vector<32x128xf32>
    %cst_73 = arith.constant 0.000000e+00 : f32
    %91 = vector.broadcast %cst_73 : f32 to vector<32x128xf32>
    %92 = arith.maximumf %90, %91 : vector<32x128xf32>
    %c0_74 = arith.constant 0 : index
    %c0_75 = arith.constant 0 : index
    %93 = vector.load %arg10[%c0_74, %c0_75] : memref<32x128xf32, #tpu.memory_space<vmem>>, vector<32x128xf32>
    tpu.vector_store %arg10[%c0_74, %c0_75], %92 {strides = array<i32>} : memref<32x128xf32, #tpu.memory_space<vmem>>, vector<32x128xf32>,
    return
  }
}

</mosaic_0001>

<llo_original>
// kernel: tpu_custom_call.1
$region0: #{tpu_custom_call.1}
  #allocation0 [shape = 'u32[]', space=smem, size = 0x4, offset = 0x4, fixed_abs, tag = 'smem constant byte address 0x4 - core index']
  #allocation1 [shape = 'u32[72,128]{1,0:T(1,128)}', space=vmem, size = 0x9000, scoped, tag = 'internal scratch']
  %s0 = inlined_call_operand.hbm [shape: f32[32,64], index: 0, kind: input, shape index: {}]
  %s1 = inlined_call_operand.hbm [shape: f32[3,32,32], index: 1, kind: input, shape index: {}]
  %s2 = inlined_call_operand.hbm [shape: f32[3,64,128], index: 2, kind: input, shape index: {}]
  %s3 = inlined_call_operand.hbm [shape: f32[128,128], index: 3, kind: input, shape index: {}]
  %s4 = inlined_call_operand.vmem [shape: f32[1,128], index: 4, kind: input, shape index: {}]
  %s5 = inlined_call_operand.vmem [shape: f32[1,128], index: 5, kind: input, shape index: {}]
  %s6 = inlined_call_operand.hbm [shape: f32[3,128,128], index: 6, kind: input, shape index: {}]
  %s7 = inlined_call_operand.hbm [shape: f32[128,128], index: 7, kind: input, shape index: {}]
  %s8 = inlined_call_operand.vmem [shape: f32[1,128], index: 8, kind: input, shape index: {}]
  %s9 = inlined_call_operand.vmem [shape: f32[1,128], index: 9, kind: input, shape index: {}]
  %s10 = inlined_call_operand.hbm [shape: f32[32,128], index: 10, kind: output, shape index: {}]
  %s11 = sld [smem:[#allocation0]]
  $region74: #{tpu_custom_call.1} parent=0
    _
  %s13 = ssub.s32 1, %s11
  %s14 = scalar_select 0, %s13, %s11
  $region1: #{tpu_custom_call.1} parent=0
    #allocation2 [shape = 'u8[16384]{0}', space=vmem, size = 0x4000, scoped, tag = 'input window, operand 0, single buffered']
    #allocation3 [shape = 's32[1]{0}', space=sflag, size = 0x4, scoped, tag = 'scoped memory for tpu_custom_call.1']
    #allocation4 [shape = 's32[1]{0}', space=sflag, size = 0x4, scoped, tag = 'scoped memory for tpu_custom_call.1']
    #allocation5 [shape = 'u8[49152]{0}', space=vmem, size = 0xc000, scoped, tag = 'input window, operand 1, single buffered']
    #allocation6 [shape = 's32[1]{0}', space=sflag, size = 0x4, scoped, tag = 'scoped memory for tpu_custom_call.1']
    #allocation7 [shape = 'u8[98304]{0}', space=vmem, size = 0x18000, scoped, tag = 'input window, operand 2, single buffered']
    #allocation8 [shape = 'u8[65536]{0}', space=vmem, size = 0x10000, scoped, tag = 'input window, operand 3, single buffered']
    #allocation9 [shape = 's32[1]{0}', space=sflag, size = 0x4, scoped, tag = 'scoped memory for tpu_custom_call.1']
    #allocation10 [shape = 'u8[196608]{0}', space=vmem, size = 0x30000, scoped, tag = 'input window, operand 6, single buffered']
    #allocation11 [shape = 'u8[65536]{0}', space=vmem, size = 0x10000, scoped, tag = 'input window, operand 7, single buffered']
    #allocation12 [shape = 's32[1]{0}', space=sflag, size = 0x4, scoped, tag = 'scoped memory for tpu_custom_call.1']
    #allocation13 [shape = 'u8[16384]{0}', space=vmem, size = 0x4000, scoped, tag = 'output window, operand 0, single buffered']
    %15 = vsyncpa [#allocation3], 0
    %16 = vsyncpa [#allocation6], 0
    %17 = vsyncpa [#allocation9], 0
    %18 = vsyncpa [#allocation12], 0
    %19 = vsyncpa [#allocation4], 0
    // Predicated region
    $region2: #{tpu_custom_call.1} parent=1 // pred_check
      _
    $region3: #{tpu_custom_call.1} parent=1 // pred_check_branch
      %21 = sbr.rel (0) target = $region5
    $region4: #{tpu_custom_call.1} parent=1 // pred_region
      %23 = vsyncadd [#allocation3], 0
      %s24 = sshll.u32 %s0, 4
      %s25 = int_to_ptr.hbm [resolvable:$true] %s24
      %s26 = sshll.u32 [#allocation2], 4
      %s27 = int_to_ptr.vmem [resolvable:$true] %s26
      %32 = dma.hbm_to_vmem [thread:$0]  %s25, 512, %s27, [#allocation3], 128, 128, 8
    $region5: #{tpu_custom_call.1} parent=1 // pred_fallthru
      _
    // Predicated region
    $region6: #{tpu_custom_call.1} parent=1 // pred_check
      _
    $region7: #{tpu_custom_call.1} parent=1 // pred_check_branch
      %34 = sbr.rel (0) target = $region9
    $region8: #{tpu_custom_call.1} parent=1 // pred_region
      %36 = vsyncadd [#allocation6], 0
      %s37 = sshll.u32 %s1, 4
      %s38 = int_to_ptr.hbm [resolvable:$true] %s37
      %s39 = sshll.u32 [#allocation5], 4
      %s40 = int_to_ptr.vmem [resolvable:$true] %s39
      %45 = dma.hbm_to_vmem [thread:$0]  %s38, 1536, %s40, [#allocation6], 128, 128, 8
    $region9: #{tpu_custom_call.1} parent=1 // pred_fallthru
      _
    // Predicated region
    $region10: #{tpu_custom_call.1} parent=1 // pred_check
      _
    $region11: #{tpu_custom_call.1} parent=1 // pred_check_branch
      %47 = sbr.rel (0) target = $region13
    $region12: #{tpu_custom_call.1} parent=1 // pred_region
      %49 = vsyncadd [#allocation6], 0
      %s50 = sshll.u32 %s2, 4
      %s51 = int_to_ptr.hbm [resolvable:$true] %s50
      %s52 = sshll.u32 [#allocation7], 4
      %s53 = int_to_ptr.vmem [resolvable:$true] %s52
      %58 = dma.hbm_to_vmem [thread:$0]  %s51, 3072, %s53, [#allocation6], 128, 128, 8
    $region13: #{tpu_custom_call.1} parent=1 // pred_fallthru
      _
    // Predicated region
    $region14: #{tpu_custom_call.1} parent=1 // pred_check
      _
    $region15: #{tpu_custom_call.1} parent=1 // pred_check_branch
      %60 = sbr.rel (0) target = $region17
    $region16: #{tpu_custom_call.1} parent=1 // pred_region
      %62 = vsyncadd [#allocation9], 0
      %s63 = sshll.u32 %s3, 4
      %s64 = int_to_ptr.hbm [resolvable:$true] %s63
      %s65 = sshll.u32 [#allocation8], 4
      %s66 = int_to_ptr.vmem [resolvable:$true] %s65
      %71 = dma.hbm_to_vmem [thread:$0]  %s64, 2048, %s66, [#allocation9], 128, 128, 8
    $region17: #{tpu_custom_call.1} parent=1 // pred_fallthru
      _
    // Predicated region
    $region18: #{tpu_custom_call.1} parent=1 // pred_check
      _
    $region19: #{tpu_custom_call.1} parent=1 // pred_check_branch
      %73 = sbr.rel (0) target = $region21
    $region20: #{tpu_custom_call.1} parent=1 // pred_region
      _
    $region21: #{tpu_custom_call.1} parent=1 // pred_fallthru
      _
    // Predicated region
    $region22: #{tpu_custom_call.1} parent=1 // pred_check
      _
    $region23: #{tpu_custom_call.1} parent=1 // pred_check_branch
      %75 = sbr.rel (0) target = $region25
    $region24: #{tpu_custom_call.1} parent=1 // pred_region
      _
    $region25: #{tpu_custom_call.1} parent=1 // pred_fallthru
      _
    // Predicated region
    $region26: #{tpu_custom_call.1} parent=1 // pred_check
      _
    $region27: #{tpu_custom_call.1} parent=1 // pred_check_branch
      %77 = sbr.rel (0) target = $region29
    $region28: #{tpu_custom_call.1} parent=1 // pred_region
      %79 = vsyncadd [#allocation9], 0
      %s80 = sshll.u32 %s6, 4
      %s81 = int_to_ptr.hbm [resolvable:$true] %s80
      %s82 = sshll.u32 [#allocation10], 4
      %s83 = int_to_ptr.vmem [resolvable:$true] %s82
      %88 = dma.hbm_to_vmem [thread:$0]  %s81, 6144, %s83, [#allocation9], 128, 128, 8
    $region29: #{tpu_custom_call.1} parent=1 // pred_fallthru
      _
    // Predicated region
    $region30: #{tpu_custom_call.1} parent=1 // pred_check
      _
    $region31: #{tpu_custom_call.1} parent=1 // pred_check_branch
      %90 = sbr.rel (0) target = $region33
    $region32: #{tpu_custom_call.1} parent=1 // pred_region
      %92 = vsyncadd [#allocation12], 0
      %s93 = sshll.u32 %s7, 4
      %s94 = int_to_ptr.hbm [resolvable:$true] %s93
      %s95 = sshll.u32 [#allocation11], 4
      %s96 = int_to_ptr.vmem [resolvable:$true] %s95
      %101 = dma.hbm_to_vmem [thread:$0]  %s94, 2048, %s96, [#allocation12], 128, 128, 8
    $region33: #{tpu_custom_call.1} parent=1 // pred_fallthru
      _
    // Predicated region
    $region34: #{tpu_custom_call.1} parent=1 // pred_check
      _
    $region35: #{tpu_custom_call.1} parent=1 // pred_check_branch
      %103 = sbr.rel (0) target = $region37
    $region36: #{tpu_custom_call.1} parent=1 // pred_region
      _
    $region37: #{tpu_custom_call.1} parent=1 // pred_fallthru
      _
    // Predicated region
    $region38: #{tpu_custom_call.1} parent=1 // pred_check
      _
    $region39: #{tpu_custom_call.1} parent=1 // pred_check_branch
      %105 = sbr.rel (0) target = $region41
    $region40: #{tpu_custom_call.1} parent=1 // pred_region
      _
    $region41: #{tpu_custom_call.1} parent=1 // pred_fallthru
      _
    // Predicated region
    $region42: #{tpu_custom_call.1} parent=1 // pred_check
      _
    $region43: #{tpu_custom_call.1} parent=1 // pred_check_branch
      %107 = sbr.rel (0) target = $region45
    $region44: #{tpu_custom_call.1} parent=1 // pred_region
      %109 = dma.done [#allocation3], 512
    $region45: #{tpu_custom_call.1} parent=1 // pred_fallthru
      _
    // Predicated region
    $region46: #{tpu_custom_call.1} parent=1 // pred_check
      _
    $region47: #{tpu_custom_call.1} parent=1 // pred_check_branch
      %111 = sbr.rel (0) target = $region49
    $region48: #{tpu_custom_call.1} parent=1 // pred_region
      %113 = dma.done [#allocation6], 1536
    $region49: #{tpu_custom_call.1} parent=1 // pred_fallthru
      _
    // Predicated region
    $region50: #{tpu_custom_call.1} parent=1 // pred_check
      _
    $region51: #{tpu_custom_call.1} parent=1 // pred_check_branch
      %115 = sbr.rel (0) target = $region53
    $region52: #{tpu_custom_call.1} parent=1 // pred_region
      %117 = dma.done [#allocation6], 3072
    $region53: #{tpu_custom_call.1} parent=1 // pred_fallthru
      _
    // Predicated region
    $region54: #{tpu_custom_call.1} parent=1 // pred_check
      _
    $region55: #{tpu_custom_call.1} parent=1 // pred_check_branch
      %119 = sbr.rel (0) target = $region57
    $region56: #{tpu_custom_call.1} parent=1 // pred_region
      %121 = dma.done [#allocation9], 2048
    $region57: #{tpu_custom_call.1} parent=1 // pred_fallthru
      _
    // Predicated region
    $region58: #{tpu_custom_call.1} parent=1 // pred_check
      _
    $region59: #{tpu_custom_call.1} parent=1 // pred_check_branch
      %123 = sbr.rel (0) target = $region61
    $region60: #{tpu_custom_call.1} parent=1 // pred_region
      %125 = dma.done [#allocation9], 6144
    $region61: #{tpu_custom_call.1} parent=1 // pred_fallthru
      _
    // Predicated region
    $region62: #{tpu_custom_call.1} parent=1 // pred_check
      _
    $region63: #{tpu_custom_call.1} parent=1 // pred_check_branch
      %127 = sbr.rel (0) target = $region65
    $region64: #{tpu_custom_call.1} parent=1 // pred_region
      %129 = dma.done [#allocation12], 2048
    $region65: #{tpu_custom_call.1} parent=1 // pred_fallthru
      _
    %v130 = vld [vmem:[#allocation2] sm:$0xff]
    %v131 = vld [vmem:[#allocation2 + $0x8] sm:$0xff]
    %v132 = vld [vmem:[#allocation2 + $0x10] sm:$0xff]
    %v133 = vld [vmem:[#allocation2 + $0x18] sm:$0xff]
    %v134 = vld [vmem:[%s4] sm:$0x1]
    %v135 = vld [vmem:[%s5] sm:$0x1]
    %v136 = vld [vmem:[#allocation7] sm:$0xff]
    %v137 = vld [vmem:[#allocation7 + $0x8] sm:$0xff]
    %v138 = vld [vmem:[#allocation7 + $0x10] sm:$0xff]
    %v139 = vld [vmem:[#allocation7 + $0x18] sm:$0xff]
    %v140 = vld [vmem:[#allocation7 + $0x20] sm:$0xff]
    %v141 = vld [vmem:[#allocation7 + $0x28] sm:$0xff]
    %v142 = vld [vmem:[#allocation7 + $0x30] sm:$0xff]
    %v143 = vld [vmem:[#allocation7 + $0x38] sm:$0xff]
    %vm144 = vcmask 523264
    %v146 = vsel %vm144, %v130, 0
    %v149 = vsel %vm144, %v131, 0
    %v152 = vsel %vm144, %v132, 0
    %v155 = vsel %vm144, %v133, 0
    %157 = vmatpush.msra.mxu0 0.0
    %158 = vmatpush.msra.mxu0 0.0
    %159 = vmatpush.msra.mxu0 0.0
    %160 = vmatpush.msra.mxu0 0.0
    %161 = vmatpush.msra.mxu0 0.0
    %162 = vmatpush.msra.mxu0 0.0
    %163 = vmatpush.msra.mxu0 0.0
    %164 = vmatpush.msra.mxu0 0.0
    %165 = vmatpush.msra.mxu0 %v143
    %166 = vmatpush.msra.mxu0 %v142
    %167 = vmatpush.msra.mxu0 %v141
    %168 = vmatpush.msra.mxu0 %v140
    %169 = vmatpush.msra.mxu0 %v139
    %170 = vmatpush.msra.mxu0 %v138
    %171 = vmatpush.msra.mxu0 %v137
    %172 = vmatpush.msra.mxu0 %v136
    %173 = vmatmul.f32.gmra.mxu0 %v146
    %v174 = vpop.f32.mrf.mxu0
    %v175 = vadd.f32 0.0, %v174
    %176 = vmatmul.f32.gmra.mxu0 %v149
    %v177 = vpop.f32.mrf.mxu0
    %v178 = vadd.f32 0.0, %v177
    %179 = vmatmul.f32.gmra.mxu0 %v152
    %v180 = vpop.f32.mrf.mxu0
    %v181 = vadd.f32 0.0, %v180
    %182 = vmatmul.f32.gmra.mxu0 %v155
    %v183 = vpop.f32.mrf.mxu0
    %v184 = vadd.f32 0.0, %v183
    %185 = vdwg.mxu0
    %v186 = vld [vmem:[#allocation5] sm:$0xff]
    %v187 = vld [vmem:[#allocation5 + $0x8] sm:$0xff]
    %v188 = vld [vmem:[#allocation5 + $0x10] sm:$0xff]
    %v189 = vld [vmem:[#allocation5 + $0x18] sm:$0xff]
    %s190 = scalar_lea.vmem [#allocation7], 64
    %v191 = vld [vmem:[%s190] sm:$0xff]
    %v192 = vld [vmem:[%s190 + $0x8] sm:$0xff]
    %v193 = vld [vmem:[%s190 + $0x10] sm:$0xff]
    %v194 = vld [vmem:[%s190 + $0x18] sm:$0xff]
    %v195 = vld [vmem:[%s190 + $0x20] sm:$0xff]
    %v196 = vld [vmem:[%s190 + $0x28] sm:$0xff]
    %v197 = vld [vmem:[%s190 + $0x30] sm:$0xff]
    %v198 = vld [vmem:[%s190 + $0x38] sm:$0xff]
    %199 = vmatpush.msra.mxu0 0.0
    %200 = vmatpush.msra.mxu0 0.0
    %201 = vmatpush.msra.mxu0 0.0
    %202 = vmatpush.msra.mxu0 0.0
    %203 = vmatpush.msra.mxu0 0.0
    %204 = vmatpush.msra.mxu0 0.0
    %205 = vmatpush.msra.mxu0 0.0
    %206 = vmatpush.msra.mxu0 0.0
    %207 = vmatpush.msra.mxu0 %v198
    %208 = vmatpush.msra.mxu0 %v197
    %209 = vmatpush.msra.mxu0 %v196
    %210 = vmatpush.msra.mxu0 %v195
    %211 = vmatpush.msra.mxu0 %v194
    %212 = vmatpush.msra.mxu0 %v193
    %213 = vmatpush.msra.mxu0 %v192
    %214 = vmatpush.msra.mxu0 %v191
    %215 = vmatmul.f32.gmra.mxu0 %v146
    %v216 = vpop.f32.mrf.mxu0
    %v217 = vadd.f32 0.0, %v216
    %218 = vmatmul.f32.gmra.mxu0 %v149
    %v219 = vpop.f32.mrf.mxu0
    %v220 = vadd.f32 0.0, %v219
    %221 = vmatmul.f32.gmra.mxu0 %v152
    %v222 = vpop.f32.mrf.mxu0
    %v223 = vadd.f32 0.0, %v222
    %224 = vmatmul.f32.gmra.mxu0 %v155
    %v225 = vpop.f32.mrf.mxu0
    %v226 = vadd.f32 0.0, %v225
    %227 = vdwg.mxu0
    %s228 = scalar_lea.vmem [#allocation5], 32
    %v229 = vld [vmem:[%s228] sm:$0xff]
    %v230 = vld [vmem:[%s228 + $0x8] sm:$0xff]
    %v231 = vld [vmem:[%s228 + $0x10] sm:$0xff]
    %v232 = vld [vmem:[%s228 + $0x18] sm:$0xff]
    %vm233 = vcmask 261120
    %v235 = vsel %vm233, %v229, 0
    %v238 = vsel %vm233, %v230, 0
    %v241 = vsel %vm233, %v231, 0
    %v244 = vsel %vm233, %v232, 0
    %246 = vmatpush.msra.mxu0 0.0
    %247 = vmatpush.msra.mxu0 0.0
    %248 = vmatpush.msra.mxu0 0.0
    %249 = vmatpush.msra.mxu0 0.0
    %250 = vmatpush.msra.mxu0 0.0
    %251 = vmatpush.msra.mxu0 0.0
    %252 = vmatpush.msra.mxu0 0.0
    %253 = vmatpush.msra.mxu0 0.0
    %254 = vmatpush.msra.mxu0 0.0
    %255 = vmatpush.msra.mxu0 0.0
    %256 = vmatpush.msra.mxu0 0.0
    %257 = vmatpush.msra.mxu0 0.0
    %258 = vmatpush.msra.mxu0 %v226
    %259 = vmatpush.msra.mxu0 %v223
    %260 = vmatpush.msra.mxu0 %v220
    %261 = vmatpush.msra.mxu0 %v217
    %262 = vmatmul.f32.gmra.mxu0 %v235
    %v263 = vpop.f32.mrf.mxu0
    %v264 = vadd.f32 0.0, %v263
    %265 = vmatmul.f32.gmra.mxu0 %v238
    %v266 = vpop.f32.mrf.mxu0
    %v267 = vadd.f32 0.0, %v266
    %268 = vmatmul.f32.gmra.mxu0 %v241
    %v269 = vpop.f32.mrf.mxu0
    %v270 = vadd.f32 0.0, %v269
    %271 = vmatmul.f32.gmra.mxu0 %v244
    %v272 = vpop.f32.mrf.mxu0
    %v273 = vadd.f32 0.0, %v272
    %274 = vdwg.mxu0
    %v276 = vsel %vm233, %v186, 0
    %v279 = vsel %vm233, %v187, 0
    %v282 = vsel %vm233, %v188, 0
    %v285 = vsel %vm233, %v189, 0
    %287 = vmatpush.msra.mxu0 0.0
    %288 = vmatpush.msra.mxu0 0.0
    %289 = vmatpush.msra.mxu0 0.0
    %290 = vmatpush.msra.mxu0 0.0
    %291 = vmatpush.msra.mxu0 0.0
    %292 = vmatpush.msra.mxu0 0.0
    %293 = vmatpush.msra.mxu0 0.0
    %294 = vmatpush.msra.mxu0 0.0
    %295 = vmatpush.msra.mxu0 0.0
    %296 = vmatpush.msra.mxu0 0.0
    %297 = vmatpush.msra.mxu0 0.0
    %298 = vmatpush.msra.mxu0 0.0
    %299 = vmatpush.msra.mxu0 %v184
    %300 = vmatpush.msra.mxu0 %v181
    %301 = vmatpush.msra.mxu0 %v178
    %302 = vmatpush.msra.mxu0 %v175
    %303 = vmatmul.f32.gmra.mxu0 %v276
    %v304 = vpop.f32.mrf.mxu0
    %v305 = vadd.f32 %v264, %v304
    %306 = vmatmul.f32.gmra.mxu0 %v279
    %v307 = vpop.f32.mrf.mxu0
    %v308 = vadd.f32 %v267, %v307
    %309 = vmatmul.f32.gmra.mxu0 %v282
    %v310 = vpop.f32.mrf.mxu0
    %v311 = vadd.f32 %v270, %v310
    %312 = vmatmul.f32.gmra.mxu0 %v285
    %v313 = vpop.f32.mrf.mxu0
    %v314 = vadd.f32 %v273, %v313
    %315 = vdwg.mxu0
    %s316 = scalar_lea.vmem [#allocation7], 128
    %v317 = vld [vmem:[%s316] sm:$0xff]
    %v318 = vld [vmem:[%s316 + $0x8] sm:$0xff]
    %v319 = vld [vmem:[%s316 + $0x10] sm:$0xff]
    %v320 = vld [vmem:[%s316 + $0x18] sm:$0xff]
    %v321 = vld [vmem:[%s316 + $0x20] sm:$0xff]
    %v322 = vld [vmem:[%s316 + $0x28] sm:$0xff]
    %v323 = vld [vmem:[%s316 + $0x30] sm:$0xff]
    %v324 = vld [vmem:[%s316 + $0x38] sm:$0xff]
    %325 = vmatpush.msra.mxu0 0.0
    %326 = vmatpush.msra.mxu0 0.0
    %327 = vmatpush.msra.mxu0 0.0
    %328 = vmatpush.msra.mxu0 0.0
    %329 = vmatpush.msra.mxu0 0.0
    %330 = vmatpush.msra.mxu0 0.0
    %331 = vmatpush.msra.mxu0 0.0
    %332 = vmatpush.msra.mxu0 0.0
    %333 = vmatpush.msra.mxu0 %v324
    %334 = vmatpush.msra.mxu0 %v323
    %335 = vmatpush.msra.mxu0 %v322
    %336 = vmatpush.msra.mxu0 %v321
    %337 = vmatpush.msra.mxu0 %v320
    %338 = vmatpush.msra.mxu0 %v319
    %339 = vmatpush.msra.mxu0 %v318
    %340 = vmatpush.msra.mxu0 %v317
    %341 = vmatmul.f32.gmra.mxu0 %v146
    %v342 = vpop.f32.mrf.mxu0
    %v343 = vadd.f32 0.0, %v342
    %344 = vmatmul.f32.gmra.mxu0 %v149
    %v345 = vpop.f32.mrf.mxu0
    %v346 = vadd.f32 0.0, %v345
    %347 = vmatmul.f32.gmra.mxu0 %v152
    %v348 = vpop.f32.mrf.mxu0
    %v349 = vadd.f32 0.0, %v348
    %350 = vmatmul.f32.gmra.mxu0 %v155
    %v351 = vpop.f32.mrf.mxu0
    %v352 = vadd.f32 0.0, %v351
    %353 = vdwg.mxu0
    %s354 = scalar_lea.vmem [#allocation5], 64
    %v355 = vld [vmem:[%s354] sm:$0xff]
    %v356 = vld [vmem:[%s354 + $0x8] sm:$0xff]
    %v357 = vld [vmem:[%s354 + $0x10] sm:$0xff]
    %v358 = vld [vmem:[%s354 + $0x18] sm:$0xff]
    %v360 = vsel %vm233, %v355, 0
    %v363 = vsel %vm233, %v356, 0
    %v366 = vsel %vm233, %v357, 0
    %v369 = vsel %vm233, %v358, 0
    %371 = vmatpush.msra.mxu0 0.0
    %372 = vmatpush.msra.mxu0 0.0
    %373 = vmatpush.msra.mxu0 0.0
    %374 = vmatpush.msra.mxu0 0.0
    %375 = vmatpush.msra.mxu0 0.0
    %376 = vmatpush.msra.mxu0 0.0
    %377 = vmatpush.msra.mxu0 0.0
    %378 = vmatpush.msra.mxu0 0.0
    %379 = vmatpush.msra.mxu0 0.0
    %380 = vmatpush.msra.mxu0 0.0
    %381 = vmatpush.msra.mxu0 0.0
    %382 = vmatpush.msra.mxu0 0.0
    %383 = vmatpush.msra.mxu0 %v352
    %384 = vmatpush.msra.mxu0 %v349
    %385 = vmatpush.msra.mxu0 %v346
    %386 = vmatpush.msra.mxu0 %v343
    %387 = vmatmul.f32.gmra.mxu0 %v360
    %v388 = vpop.f32.mrf.mxu0
    %v389 = vadd.f32 0.0, %v388
    %390 = vmatmul.f32.gmra.mxu0 %v363
    %v391 = vpop.f32.mrf.mxu0
    %v392 = vadd.f32 0.0, %v391
    %393 = vmatmul.f32.gmra.mxu0 %v366
    %v394 = vpop.f32.mrf.mxu0
    %v395 = vadd.f32 0.0, %v394
    %396 = vmatmul.f32.gmra.mxu0 %v369
    %v397 = vpop.f32.mrf.mxu0
    %v398 = vadd.f32 0.0, %v397
    %399 = vdwg.mxu0
    %v400 = vadd.f32 %v305, %v389
    %v401 = vadd.f32 %v308, %v392
    %v402 = vadd.f32 %v311, %v395
    %v403 = vadd.f32 %v314, %v398
    %v404 = vld [vmem:[#allocation8] sm:$0xff]
    %v405 = vld [vmem:[#allocation8 + $0x8] sm:$0xff]
    %v406 = vld [vmem:[#allocation8 + $0x10] sm:$0xff]
    %v407 = vld [vmem:[#allocation8 + $0x18] sm:$0xff]
    %v408 = vld [vmem:[#allocation8 + $0x20] sm:$0xff]
    %v409 = vld [vmem:[#allocation8 + $0x28] sm:$0xff]
    %v410 = vld [vmem:[#allocation8 + $0x30] sm:$0xff]
    %v411 = vld [vmem:[#allocation8 + $0x38] sm:$0xff]
    %v412 = vld [vmem:[#allocation8 + $0x40] sm:$0xff]
    %v413 = vld [vmem:[#allocation8 + $0x48] sm:$0xff]
    %v414 = vld [vmem:[#allocation8 + $0x50] sm:$0xff]
    %v415 = vld [vmem:[#allocation8 + $0x58] sm:$0xff]
    %v416 = vld [vmem:[#allocation8 + $0x60] sm:$0xff]
    %v417 = vld [vmem:[#allocation8 + $0x68] sm:$0xff]
    %v418 = vld [vmem:[#allocation8 + $0x70] sm:$0xff]
    %v419 = vld [vmem:[#allocation8 + $0x78] sm:$0xff]
    %420 = vmatpush.msra.mxu0 %v419
    %421 = vmatpush.msra.mxu0 %v418
    %422 = vmatpush.msra.mxu0 %v417
    %423 = vmatpush.msra.mxu0 %v416
    %424 = vmatpush.msra.mxu0 %v415
    %425 = vmatpush.msra.mxu0 %v414
    %426 = vmatpush.msra.mxu0 %v413
    %427 = vmatpush.msra.mxu0 %v412
    %428 = vmatpush.msra.mxu0 %v411
    %429 = vmatpush.msra.mxu0 %v410
    %430 = vmatpush.msra.mxu0 %v409
    %431 = vmatpush.msra.mxu0 %v408
    %432 = vmatpush.msra.mxu0 %v407
    %433 = vmatpush.msra.mxu0 %v406
    %434 = vmatpush.msra.mxu0 %v405
    %435 = vmatpush.msra.mxu0 %v404
    %436 = vmatmul.f32.gmra.mxu0 %v400
    %v437 = vpop.f32.mrf.mxu0
    %v438 = vadd.f32 0.0, %v437
    %439 = vmatmul.f32.gmra.mxu0 %v401
    %v440 = vpop.f32.mrf.mxu0
    %v441 = vadd.f32 0.0, %v440
    %442 = vmatmul.f32.gmra.mxu0 %v402
    %v443 = vpop.f32.mrf.mxu0
    %v444 = vadd.f32 0.0, %v443
    %445 = vmatmul.f32.gmra.mxu0 %v403
    %v446 = vpop.f32.mrf.mxu0
    %v447 = vadd.f32 0.0, %v446
    %448 = vdwg.mxu0
    %v449 = vadd.f32 %v438, %v441
    %v450 = vadd.f32 %v449, %v444
    %v451 = vadd.f32 %v450, %v447
    %v452 = vrot.slane %v451, 4
    %v453 = vadd.f32 %v451, %v452
    %v454 = vrot.slane %v453, 2
    %v455 = vadd.f32 %v453, %v454
    %v456 = vrot.slane %v455, 1
    %v457 = vadd.f32 %v455, %v456
    %v458 = vmul.f32 %v457, 0.001953125
    %v459 = vsub.f32 %v400, %v458
    %v460 = vsub.f32 %v401, %v458
    %v461 = vsub.f32 %v402, %v458
    %v462 = vsub.f32 %v403, %v458
    %v463 = vmul.f32 %v459, %v459
    %v464 = vmul.f32 %v460, %v460
    %v465 = vmul.f32 %v461, %v461
    %v466 = vmul.f32 %v462, %v462
    %467 = vmatpush.msra.mxu0 %v419
    %468 = vmatpush.msra.mxu0 %v418
    %469 = vmatpush.msra.mxu0 %v417
    %470 = vmatpush.msra.mxu0 %v416
    %471 = vmatpush.msra.mxu0 %v415
    %472 = vmatpush.msra.mxu0 %v414
    %473 = vmatpush.msra.mxu0 %v413
    %474 = vmatpush.msra.mxu0 %v412
    %475 = vmatpush.msra.mxu0 %v411
    %476 = vmatpush.msra.mxu0 %v410
    %477 = vmatpush.msra.mxu0 %v409
    %478 = vmatpush.msra.mxu0 %v408
    %479 = vmatpush.msra.mxu0 %v407
    %480 = vmatpush.msra.mxu0 %v406
    %481 = vmatpush.msra.mxu0 %v405
    %482 = vmatpush.msra.mxu0 %v404
    %483 = vmatmul.f32.gmra.mxu0 %v463
    %v484 = vpop.f32.mrf.mxu0
    %v485 = vadd.f32 0.0, %v484
    %486 = vmatmul.f32.gmra.mxu0 %v464
    %v487 = vpop.f32.mrf.mxu0
    %v488 = vadd.f32 0.0, %v487
    %489 = vmatmul.f32.gmra.mxu0 %v465
    %v490 = vpop.f32.mrf.mxu0
    %v491 = vadd.f32 0.0, %v490
    %492 = vmatmul.f32.gmra.mxu0 %v466
    %v493 = vpop.f32.mrf.mxu0
    %v494 = vadd.f32 0.0, %v493
    %495 = vdwg.mxu0
    %v496 = vadd.f32 %v485, %v488
    %v497 = vadd.f32 %v496, %v491
    %v498 = vadd.f32 %v497, %v494
    %v499 = vrot.slane %v498, 4
    %v500 = vadd.f32 %v498, %v499
    %v501 = vrot.slane %v500, 2
    %v502 = vadd.f32 %v500, %v501
    %v503 = vrot.slane %v502, 1
    %v504 = vadd.f32 %v502, %v503
    %v505 = vmul.f32 %v504, 0.001953125
    %v506 = vadd.f32 %v505, 1e-05
    %v507 = vrsqrt.pop %v506
    %v508 = vmul.f32 %v507, %v506
    %v509 = vmul.f32 %v508, %v507
    %v510 = vmul.f32 0.5, %v509
    %v511 = vsub.f32 1.5, %v510
    %v512 = vmul.f32 %v507, %v511
    %vm513 = vweird.f32 %v506
    %vm514 = vweird.f32 %v507
    %vm515 = vmor %vm513, %vm514
    %v516 = vsel %vm515, %v507, %v512
    %v517 = vmul.f32 %v134, %v516
    %v519 = vperm.slane %v517, 0
    %v521 = vmul.f32 %v459, %v519
    %v522 = vmul.f32 %v460, %v519
    %v523 = vmul.f32 %v461, %v519
    %v524 = vmul.f32 %v462, %v519
    %v526 = vperm.slane %v135, 0
    %v528 = vadd.f32 %v521, %v526
    %v529 = vadd.f32 %v522, %v526
    %v530 = vadd.f32 %v523, %v526
    %v531 = vadd.f32 %v524, %v526
    %v532 = vmax.f32 %v528, 0.0
    %v533 = vmax.f32 %v529, 0.0
    %v534 = vmax.f32 %v530, 0.0
    %v535 = vmax.f32 %v531, 0.0
    %v536 = vld [vmem:[%s8] sm:$0x1]
    %v537 = vld [vmem:[%s9] sm:$0x1]
    %v538 = vld [vmem:[#allocation10] sm:$0xff]
    %v539 = vld [vmem:[#allocation10 + $0x8] sm:$0xff]
    %v540 = vld [vmem:[#allocation10 + $0x10] sm:$0xff]
    %v541 = vld [vmem:[#allocation10 + $0x18] sm:$0xff]
    %v542 = vld [vmem:[#allocation10 + $0x20] sm:$0xff]
    %v543 = vld [vmem:[#allocation10 + $0x28] sm:$0xff]
    %v544 = vld [vmem:[#allocation10 + $0x30] sm:$0xff]
    %v545 = vld [vmem:[#allocation10 + $0x38] sm:$0xff]
    %v546 = vld [vmem:[#allocation10 + $0x40] sm:$0xff]
    %v547 = vld [vmem:[#allocation10 + $0x48] sm:$0xff]
    %v548 = vld [vmem:[#allocation10 + $0x50] sm:$0xff]
    %v549 = vld [vmem:[#allocation10 + $0x58] sm:$0xff]
    %v550 = vld [vmem:[#allocation10 + $0x60] sm:$0xff]
    %v551 = vld [vmem:[#allocation10 + $0x68] sm:$0xff]
    %v552 = vld [vmem:[#allocation10 + $0x70] sm:$0xff]
    %v553 = vld [vmem:[#allocation10 + $0x78] sm:$0xff]
    %554 = vmatpush.msra.mxu0 %v553
    %555 = vmatpush.msra.mxu0 %v552
    %556 = vmatpush.msra.mxu0 %v551
    %557 = vmatpush.msra.mxu0 %v550
    %558 = vmatpush.msra.mxu0 %v549
    %559 = vmatpush.msra.mxu0 %v548
    %560 = vmatpush.msra.mxu0 %v547
    %561 = vmatpush.msra.mxu0 %v546
    %562 = vmatpush.msra.mxu0 %v545
    %563 = vmatpush.msra.mxu0 %v544
    %564 = vmatpush.msra.mxu0 %v543
    %565 = vmatpush.msra.mxu0 %v542
    %566 = vmatpush.msra.mxu0 %v541
    %567 = vmatpush.msra.mxu0 %v540
    %568 = vmatpush.msra.mxu0 %v539
    %569 = vmatpush.msra.mxu0 %v538
    %570 = vmatmul.f32.gmra.mxu0 %v532
    %v571 = vpop.f32.mrf.mxu0
    %v572 = vadd.f32 0.0, %v571
    %573 = vmatmul.f32.gmra.mxu0 %v533
    %v574 = vpop.f32.mrf.mxu0
    %v575 = vadd.f32 0.0, %v574
    %576 = vmatmul.f32.gmra.mxu0 %v534
    %v577 = vpop.f32.mrf.mxu0
    %v578 = vadd.f32 0.0, %v577
    %579 = vmatmul.f32.gmra.mxu0 %v535
    %v580 = vpop.f32.mrf.mxu0
    %v581 = vadd.f32 0.0, %v580
    %582 = vdwg.mxu0
    %s583 = scalar_lea.vmem [#allocation10], 128
    %v584 = vld [vmem:[%s583] sm:$0xff]
    %v585 = vld [vmem:[%s583 + $0x8] sm:$0xff]
    %v586 = vld [vmem:[%s583 + $0x10] sm:$0xff]
    %v587 = vld [vmem:[%s583 + $0x18] sm:$0xff]
    %v588 = vld [vmem:[%s583 + $0x20] sm:$0xff]
    %v589 = vld [vmem:[%s583 + $0x28] sm:$0xff]
    %v590 = vld [vmem:[%s583 + $0x30] sm:$0xff]
    %v591 = vld [vmem:[%s583 + $0x38] sm:$0xff]
    %v592 = vld [vmem:[%s583 + $0x40] sm:$0xff]
    %v593 = vld [vmem:[%s583 + $0x48] sm:$0xff]
    %v594 = vld [vmem:[%s583 + $0x50] sm:$0xff]
    %v595 = vld [vmem:[%s583 + $0x58] sm:$0xff]
    %v596 = vld [vmem:[%s583 + $0x60] sm:$0xff]
    %v597 = vld [vmem:[%s583 + $0x68] sm:$0xff]
    %v598 = vld [vmem:[%s583 + $0x70] sm:$0xff]
    %v599 = vld [vmem:[%s583 + $0x78] sm:$0xff]
    %600 = vmatpush.msra.mxu0 %v599
    %601 = vmatpush.msra.mxu0 %v598
    %602 = vmatpush.msra.mxu0 %v597
    %603 = vmatpush.msra.mxu0 %v596
    %604 = vmatpush.msra.mxu0 %v595
    %605 = vmatpush.msra.mxu0 %v594
    %606 = vmatpush.msra.mxu0 %v593
    %607 = vmatpush.msra.mxu0 %v592
    %608 = vmatpush.msra.mxu0 %v591
    %609 = vmatpush.msra.mxu0 %v590
    %610 = vmatpush.msra.mxu0 %v589
    %611 = vmatpush.msra.mxu0 %v588
    %612 = vmatpush.msra.mxu0 %v587
    %613 = vmatpush.msra.mxu0 %v586
    %614 = vmatpush.msra.mxu0 %v585
    %615 = vmatpush.msra.mxu0 %v584
    %616 = vmatmul.f32.gmra.mxu0 %v532
    %v617 = vpop.f32.mrf.mxu0
    %v618 = vadd.f32 0.0, %v617
    %619 = vmatmul.f32.gmra.mxu0 %v533
    %v620 = vpop.f32.mrf.mxu0
    %v621 = vadd.f32 0.0, %v620
    %622 = vmatmul.f32.gmra.mxu0 %v534
    %v623 = vpop.f32.mrf.mxu0
    %v624 = vadd.f32 0.0, %v623
    %625 = vmatmul.f32.gmra.mxu0 %v535
    %v626 = vpop.f32.mrf.mxu0
    %v627 = vadd.f32 0.0, %v626
    %628 = vdwg.mxu0
    %629 = vmatpush.msra.mxu0 0.0
    %630 = vmatpush.msra.mxu0 0.0
    %631 = vmatpush.msra.mxu0 0.0
    %632 = vmatpush.msra.mxu0 0.0
    %633 = vmatpush.msra.mxu0 0.0
    %634 = vmatpush.msra.mxu0 0.0
    %635 = vmatpush.msra.mxu0 0.0
    %636 = vmatpush.msra.mxu0 0.0
    %637 = vmatpush.msra.mxu0 0.0
    %638 = vmatpush.msra.mxu0 0.0
    %639 = vmatpush.msra.mxu0 0.0
    %640 = vmatpush.msra.mxu0 0.0
    %641 = vmatpush.msra.mxu0 %v627
    %642 = vmatpush.msra.mxu0 %v624
    %643 = vmatpush.msra.mxu0 %v621
    %644 = vmatpush.msra.mxu0 %v618
    %645 = vmatmul.f32.gmra.mxu0 %v235
    %v646 = vpop.f32.mrf.mxu0
    %v647 = vadd.f32 0.0, %v646
    %648 = vmatmul.f32.gmra.mxu0 %v238
    %v649 = vpop.f32.mrf.mxu0
    %v650 = vadd.f32 0.0, %v649
    %651 = vmatmul.f32.gmra.mxu0 %v241
    %v652 = vpop.f32.mrf.mxu0
    %v653 = vadd.f32 0.0, %v652
    %654 = vmatmul.f32.gmra.mxu0 %v244
    %v655 = vpop.f32.mrf.mxu0
    %v656 = vadd.f32 0.0, %v655
    %657 = vdwg.mxu0
    %658 = vmatpush.msra.mxu0 0.0
    %659 = vmatpush.msra.mxu0 0.0
    %660 = vmatpush.msra.mxu0 0.0
    %661 = vmatpush.msra.mxu0 0.0
    %662 = vmatpush.msra.mxu0 0.0
    %663 = vmatpush.msra.mxu0 0.0
    %664 = vmatpush.msra.mxu0 0.0
    %665 = vmatpush.msra.mxu0 0.0
    %666 = vmatpush.msra.mxu0 0.0
    %667 = vmatpush.msra.mxu0 0.0
    %668 = vmatpush.msra.mxu0 0.0
    %669 = vmatpush.msra.mxu0 0.0
    %670 = vmatpush.msra.mxu0 %v581
    %671 = vmatpush.msra.mxu0 %v578
    %672 = vmatpush.msra.mxu0 %v575
    %673 = vmatpush.msra.mxu0 %v572
    %674 = vmatmul.f32.gmra.mxu0 %v276
    %v675 = vpop.f32.mrf.mxu0
    %v676 = vadd.f32 %v647, %v675
    %677 = vmatmul.f32.gmra.mxu0 %v279
    %v678 = vpop.f32.mrf.mxu0
    %v679 = vadd.f32 %v650, %v678
    %680 = vmatmul.f32.gmra.mxu0 %v282
    %v681 = vpop.f32.mrf.mxu0
    %v682 = vadd.f32 %v653, %v681
    %683 = vmatmul.f32.gmra.mxu0 %v285
    %v684 = vpop.f32.mrf.mxu0
    %v685 = vadd.f32 %v656, %v684
    %686 = vdwg.mxu0
    %s687 = scalar_lea.vmem [#allocation10], 256
    %v688 = vld [vmem:[%s687] sm:$0xff]
    %v689 = vld [vmem:[%s687 + $0x8] sm:$0xff]
    %v690 = vld [vmem:[%s687 + $0x10] sm:$0xff]
    %v691 = vld [vmem:[%s687 + $0x18] sm:$0xff]
    %v692 = vld [vmem:[%s687 + $0x20] sm:$0xff]
    %v693 = vld [vmem:[%s687 + $0x28] sm:$0xff]
    %v694 = vld [vmem:[%s687 + $0x30] sm:$0xff]
    %v695 = vld [vmem:[%s687 + $0x38] sm:$0xff]
    %v696 = vld [vmem:[%s687 + $0x40] sm:$0xff]
    %v697 = vld [vmem:[%s687 + $0x48] sm:$0xff]
    %v698 = vld [vmem:[%s687 + $0x50] sm:$0xff]
    %v699 = vld [vmem:[%s687 + $0x58] sm:$0xff]
    %v700 = vld [vmem:[%s687 + $0x60] sm:$0xff]
    %v701 = vld [vmem:[%s687 + $0x68] sm:$0xff]
    %v702 = vld [vmem:[%s687 + $0x70] sm:$0xff]
    %v703 = vld [vmem:[%s687 + $0x78] sm:$0xff]
    %704 = vmatpush.msra.mxu0 %v703
    %705 = vmatpush.msra.mxu0 %v702
    %706 = vmatpush.msra.mxu0 %v701
    %707 = vmatpush.msra.mxu0 %v700
    %708 = vmatpush.msra.mxu0 %v699
    %709 = vmatpush.msra.mxu0 %v698
    %710 = vmatpush.msra.mxu0 %v697
    %711 = vmatpush.msra.mxu0 %v696
    %712 = vmatpush.msra.mxu0 %v695
    %713 = vmatpush.msra.mxu0 %v694
    %714 = vmatpush.msra.mxu0 %v693
    %715 = vmatpush.msra.mxu0 %v692
    %716 = vmatpush.msra.mxu0 %v691
    %717 = vmatpush.msra.mxu0 %v690
    %718 = vmatpush.msra.mxu0 %v689
    %719 = vmatpush.msra.mxu0 %v688
    %720 = vmatmul.f32.gmra.mxu0 %v532
    %v721 = vpop.f32.mrf.mxu0
    %v722 = vadd.f32 0.0, %v721
    %723 = vmatmul.f32.gmra.mxu0 %v533
    %v724 = vpop.f32.mrf.mxu0
    %v725 = vadd.f32 0.0, %v724
    %726 = vmatmul.f32.gmra.mxu0 %v534
    %v727 = vpop.f32.mrf.mxu0
    %v728 = vadd.f32 0.0, %v727
    %729 = vmatmul.f32.gmra.mxu0 %v535
    %v730 = vpop.f32.mrf.mxu0
    %v731 = vadd.f32 0.0, %v730
    %732 = vdwg.mxu0
    %733 = vmatpush.msra.mxu0 0.0
    %734 = vmatpush.msra.mxu0 0.0
    %735 = vmatpush.msra.mxu0 0.0
    %736 = vmatpush.msra.mxu0 0.0
    %737 = vmatpush.msra.mxu0 0.0
    %738 = vmatpush.msra.mxu0 0.0
    %739 = vmatpush.msra.mxu0 0.0
    %740 = vmatpush.msra.mxu0 0.0
    %741 = vmatpush.msra.mxu0 0.0
    %742 = vmatpush.msra.mxu0 0.0
    %743 = vmatpush.msra.mxu0 0.0
    %744 = vmatpush.msra.mxu0 0.0
    %745 = vmatpush.msra.mxu0 %v731
    %746 = vmatpush.msra.mxu0 %v728
    %747 = vmatpush.msra.mxu0 %v725
    %748 = vmatpush.msra.mxu0 %v722
    %749 = vmatmul.f32.gmra.mxu0 %v360
    %v750 = vpop.f32.mrf.mxu0
    %v751 = vadd.f32 0.0, %v750
    %752 = vmatmul.f32.gmra.mxu0 %v363
    %v753 = vpop.f32.mrf.mxu0
    %v754 = vadd.f32 0.0, %v753
    %755 = vmatmul.f32.gmra.mxu0 %v366
    %v756 = vpop.f32.mrf.mxu0
    %v757 = vadd.f32 0.0, %v756
    %758 = vmatmul.f32.gmra.mxu0 %v369
    %v759 = vpop.f32.mrf.mxu0
    %v760 = vadd.f32 0.0, %v759
    %761 = vdwg.mxu0
    %v762 = vadd.f32 %v676, %v751
    %v763 = vadd.f32 %v679, %v754
    %v764 = vadd.f32 %v682, %v757
    %v765 = vadd.f32 %v685, %v760
    %v766 = vld [vmem:[#allocation11] sm:$0xff]
    %v767 = vld [vmem:[#allocation11 + $0x8] sm:$0xff]
    %v768 = vld [vmem:[#allocation11 + $0x10] sm:$0xff]
    %v769 = vld [vmem:[#allocation11 + $0x18] sm:$0xff]
    %v770 = vld [vmem:[#allocation11 + $0x20] sm:$0xff]
    %v771 = vld [vmem:[#allocation11 + $0x28] sm:$0xff]
    %v772 = vld [vmem:[#allocation11 + $0x30] sm:$0xff]
    %v773 = vld [vmem:[#allocation11 + $0x38] sm:$0xff]
    %v774 = vld [vmem:[#allocation11 + $0x40] sm:$0xff]
    %v775 = vld [vmem:[#allocation11 + $0x48] sm:$0xff]
    %v776 = vld [vmem:[#allocation11 + $0x50] sm:$0xff]
    %v777 = vld [vmem:[#allocation11 + $0x58] sm:$0xff]
    %v778 = vld [vmem:[#allocation11 + $0x60] sm:$0xff]
    %v779 = vld [vmem:[#allocation11 + $0x68] sm:$0xff]
    %v780 = vld [vmem:[#allocation11 + $0x70] sm:$0xff]
    %v781 = vld [vmem:[#allocation11 + $0x78] sm:$0xff]
    %782 = vmatpush.msra.mxu0 %v781
    %783 = vmatpush.msra.mxu0 %v780
    %784 = vmatpush.msra.mxu0 %v779
    %785 = vmatpush.msra.mxu0 %v778
    %786 = vmatpush.msra.mxu0 %v777
    %787 = vmatpush.msra.mxu0 %v776
    %788 = vmatpush.msra.mxu0 %v775
    %789 = vmatpush.msra.mxu0 %v774
    %790 = vmatpush.msra.mxu0 %v773
    %791 = vmatpush.msra.mxu0 %v772
    %792 = vmatpush.msra.mxu0 %v771
    %793 = vmatpush.msra.mxu0 %v770
    %794 = vmatpush.msra.mxu0 %v769
    %795 = vmatpush.msra.mxu0 %v768
    %796 = vmatpush.msra.mxu0 %v767
    %797 = vmatpush.msra.mxu0 %v766
    %798 = vmatmul.f32.gmra.mxu0 %v762
    %v799 = vpop.f32.mrf.mxu0
    %v800 = vadd.f32 0.0, %v799
    %801 = vmatmul.f32.gmra.mxu0 %v763
    %v802 = vpop.f32.mrf.mxu0
    %v803 = vadd.f32 0.0, %v802
    %804 = vmatmul.f32.gmra.mxu0 %v764
    %v805 = vpop.f32.mrf.mxu0
    %v806 = vadd.f32 0.0, %v805
    %807 = vmatmul.f32.gmra.mxu0 %v765
    %v808 = vpop.f32.mrf.mxu0
    %v809 = vadd.f32 0.0, %v808
    %810 = vdwg.mxu0
    %v811 = vadd.f32 %v800, %v803
    %v812 = vadd.f32 %v811, %v806
    %v813 = vadd.f32 %v812, %v809
    %v814 = vrot.slane %v813, 4
    %v815 = vadd.f32 %v813, %v814
    %v816 = vrot.slane %v815, 2
    %v817 = vadd.f32 %v815, %v816
    %v818 = vrot.slane %v817, 1
    %v819 = vadd.f32 %v817, %v818
    %v820 = vmul.f32 %v819, 0.001953125
    %v821 = vsub.f32 %v762, %v820
    %v822 = vsub.f32 %v763, %v820
    %v823 = vsub.f32 %v764, %v820
    %v824 = vsub.f32 %v765, %v820
    %v825 = vmul.f32 %v821, %v821
    %v826 = vmul.f32 %v822, %v822
    %v827 = vmul.f32 %v823, %v823
    %v828 = vmul.f32 %v824, %v824
    %829 = vmatpush.msra.mxu0 %v781
    %830 = vmatpush.msra.mxu0 %v780
    %831 = vmatpush.msra.mxu0 %v779
    %832 = vmatpush.msra.mxu0 %v778
    %833 = vmatpush.msra.mxu0 %v777
    %834 = vmatpush.msra.mxu0 %v776
    %835 = vmatpush.msra.mxu0 %v775
    %836 = vmatpush.msra.mxu0 %v774
    %837 = vmatpush.msra.mxu0 %v773
    %838 = vmatpush.msra.mxu0 %v772
    %839 = vmatpush.msra.mxu0 %v771
    %840 = vmatpush.msra.mxu0 %v770
    %841 = vmatpush.msra.mxu0 %v769
    %842 = vmatpush.msra.mxu0 %v768
    %843 = vmatpush.msra.mxu0 %v767
    %844 = vmatpush.msra.mxu0 %v766
    %845 = vmatmul.f32.gmra.mxu0 %v825
    %v846 = vpop.f32.mrf.mxu0
    %v847 = vadd.f32 0.0, %v846
    %848 = vmatmul.f32.gmra.mxu0 %v826
    %v849 = vpop.f32.mrf.mxu0
    %v850 = vadd.f32 0.0, %v849
    %851 = vmatmul.f32.gmra.mxu0 %v827
    %v852 = vpop.f32.mrf.mxu0
    %v853 = vadd.f32 0.0, %v852
    %854 = vmatmul.f32.gmra.mxu0 %v828
    %v855 = vpop.f32.mrf.mxu0
    %v856 = vadd.f32 0.0, %v855
    %857 = vdwg.mxu0
    %v858 = vadd.f32 %v847, %v850
    %v859 = vadd.f32 %v858, %v853
    %v860 = vadd.f32 %v859, %v856
    %v861 = vrot.slane %v860, 4
    %v862 = vadd.f32 %v860, %v861
    %v863 = vrot.slane %v862, 2
    %v864 = vadd.f32 %v862, %v863
    %v865 = vrot.slane %v864, 1
    %v866 = vadd.f32 %v864, %v865
    %v867 = vmul.f32 %v866, 0.001953125
    %v868 = vadd.f32 %v867, 1e-05
    %v869 = vrsqrt.pop %v868
    %v870 = vmul.f32 %v869, %v868
    %v871 = vmul.f32 %v870, %v869
    %v872 = vmul.f32 0.5, %v871
    %v873 = vsub.f32 1.5, %v872
    %v874 = vmul.f32 %v869, %v873
    %vm875 = vweird.f32 %v868
    %vm876 = vweird.f32 %v869
    %vm877 = vmor %vm875, %vm876
    %v878 = vsel %vm877, %v869, %v874
    %v879 = vmul.f32 %v536, %v878
    %v881 = vperm.slane %v879, 0
    %v883 = vmul.f32 %v821, %v881
    %v884 = vmul.f32 %v822, %v881
    %v885 = vmul.f32 %v823, %v881
    %v886 = vmul.f32 %v824, %v881
    %v888 = vperm.slane %v537, 0
    %v890 = vadd.f32 %v883, %v888
    %v891 = vadd.f32 %v884, %v888
    %v892 = vadd.f32 %v885, %v888
    %v893 = vadd.f32 %v886, %v888
    %v894 = vmax.f32 %v890, 0.0
    %v895 = vmax.f32 %v891, 0.0
    %v896 = vmax.f32 %v892, 0.0
    %v897 = vmax.f32 %v893, 0.0
    %898 = vst [vmem:[#allocation13] sm:$0xff] %v894
    %899 = vst [vmem:[#allocation13 + $0x8] sm:$0xff] %v895
    %900 = vst [vmem:[#allocation13 + $0x10] sm:$0xff] %v896
    %901 = vst [vmem:[#allocation13 + $0x18] sm:$0xff] %v897
    // Predicated region
    $region66: #{tpu_custom_call.1} parent=1 // pred_check
      _
    $region67: #{tpu_custom_call.1} parent=1 // pred_check_branch
      %903 = sbr.rel (0) target = $region69
    $region68: #{tpu_custom_call.1} parent=1 // pred_region
      %905 = vsyncadd [#allocation4], 0
      %s906 = sshll.u32 [#allocation13], 4
      %s907 = int_to_ptr.vmem [resolvable:$true] %s906
      %s908 = sshll.u32 %s10, 4
      %s909 = int_to_ptr.hbm [resolvable:$true] %s908
      %914 = dma.vmem_to_hbm [thread:$0]  %s907, 512, %s909, [#allocation4], 128, 128, 8
    $region69: #{tpu_custom_call.1} parent=1 // pred_fallthru
      _
    // Predicated region
    $region70: #{tpu_custom_call.1} parent=1 // pred_check
      _
    $region71: #{tpu_custom_call.1} parent=1 // pred_check_branch
      %916 = sbr.rel (0) target = $region73
    $region72: #{tpu_custom_call.1} parent=1 // pred_region
      %918 = dma.done [#allocation4], 512
    $region73: #{tpu_custom_call.1} parent=1 // pred_fallthru
      _
    %919 = vsyncpa [#allocation3], 1
    %920 = vsyncpa [#allocation6], 1
    %921 = vsyncpa [#allocation9], 1
    %922 = vsyncpa [#allocation12], 1
    %923 = vsyncpa [#allocation4], 1

</llo_original>
